<compile_context>
chip_gen: v5e
topology: v5e:2x2
jax: 0.10.0
libtpu: 0.0.40
codegen_flags: <defaults>
</compile_context>

<pallas_src>
import math

import jax
import jax.numpy as jnp
from jax.experimental import pallas as pl
from jax.experimental.pallas import tpu as pltpu


def _pos_enc_kernel(x_ref, emb_ref, o_ref):
    # x_ref: (bt, ts, Dp), emb_ref: (ts, Dp), o_ref: (bt, ts, Dp).
    # emb broadcasts over the batch-tile dim; promotion/cast happens in-kernel
    # (memory-bound kernel -> the cast is free VPU filler).
    o_ref[...] = (x_ref[...] + emb_ref[...]).astype(o_ref.dtype)


def _cdiv(a, b):
    return -(-a // b)


def _vmem_physical_bytes():
    """Best-effort physical VMEM size for the current TPU generation."""
    try:
        info = pltpu.get_tpu_info()
        for attr in ("vmem_capacity_bytes", "vmem_bytes", "vmem_size_bytes"):
            v = getattr(info, attr, None)
            if v:
                return int(v)
    except Exception:
        pass
    return 64 * 1024 * 1024  # conservative: v7x per-TC VMEM


def _choose_tiles(B, Sp, x_row, out_row, emb_row, budget):
    """Pick (batch_tile, seq_tile) so the double-buffered working set
    2*(bt*ts*(x_row+out_row) + ts*emb_row) stays under `budget` bytes.

    Tiles are balanced (no tiny ragged tail); when the sequence tiles, the
    tile count is rounded to an even number so v7x's two TensorCores split the
    work evenly.  ts is a multiple of 8 unless it spans the full sequence.
    """
    xo_row = x_row + out_row
    max_ts = budget // (2 * (xo_row + emb_row))
    max_ts = max(8, (max_ts // 8) * 8)

    if Sp <= max_ts:
        ts = Sp
        avail = budget - 2 * ts * emb_row
        bt = max(1, avail // (2 * ts * xo_row))
        bt = min(bt, B)
        nb = _cdiv(B, bt)
        bt = _cdiv(B, nb)          # balance batch tiles across the grid
        return bt, ts

    ns = _cdiv(Sp, max_ts)
    if ns > 1 and ns % 2 == 1:
        ns += 1                    # even split across v7x's two TensorCores
    ts = min(max_ts, ((_cdiv(Sp, ns) + 7) // 8) * 8)
    return 1, ts


def positional_encoding(x, emb_table, batched=True, *, use_pallas=None,
                        donate_x=False, _vmem_budget=None):
    """Adds positional embeddings to x (PyTorch PositionalEncoding.forward).

    :param x: [batch, seq, d_model] if batched else [seq, d_model]
    :param emb_table: [num_positions, d_model] embedding weight
    :param batched: matches the PyTorch module's `batched` flag
    :param use_pallas: None = auto (skip Pallas for tiny tensors), bool = force
    :param donate_x: opt-in aliasing of x's buffer to the output (only do this
        if the caller does not read x afterwards, otherwise XLA inserts a copy)
    :param _vmem_budget: test hook to force small tiles / multi-step grids
    """
    squeeze_batch = False
    if not batched:
        x = x[None, ...]
        squeeze_batch = True

    B, S, D = x.shape
    P, De = emb_table.shape
    assert D == De, "d_model mismatch between x and embedding table"
    assert S <= P, "sequence length exceeds num_positions"

    # Torch's broadcasting add promotes (e.g. bf16 x + f32 emb -> f32 out).
    out_dtype = jnp.promote_types(x.dtype, emb_table.dtype)

    def _xla_add():
        out = x + emb_table[:S][None, :, :]
        return out[0] if squeeze_batch else out

    if use_pallas is None:
        # Tiny tensors: per-grid-step + launch overhead dwarfs the add.
        use_pallas = x.size >= (1 << 16)
    if not use_pallas:
        return _xla_add()

    # ---- Lane-dense layout ---------------------------------------------
    if D % 128 == 0:
        k = 1
        Sp, Dp = S, D
        x_op = x
        emb_op = emb_table            # full table; rows selected in index_map
        emb_rows = P
    else:
        k = 128 // math.gcd(D, 128)   # smallest k with (k*D) % 128 == 0
        if S % k != 0:
            # Fold impossible without padding; masked vst.msk stores would
            # dominate, so the plain XLA add is the faster correct choice.
            return _xla_add()
        Sp, Dp = S // k, D * k
        x_op = x.reshape(B, Sp, Dp)
        emb_src = emb_table if S == P else emb_table[:S]
        emb_op = emb_src.reshape(Sp, Dp)
        emb_rows = Sp

    x_item = jnp.dtype(x.dtype).itemsize
    emb_item = jnp.dtype(emb_table.dtype).itemsize
    out_item = jnp.dtype(out_dtype).itemsize

    phys = _vmem_physical_bytes()
    budget = _vmem_budget if _vmem_budget else min(24 << 20, phys // 4)
    bt, ts = _choose_tiles(B, Sp, Dp * x_item, Dp * out_item, Dp * emb_item,
                           budget)

    # Block rule: the emb block's row count must be a multiple of 8 or span the
    # whole emb operand.  Only the single-tile path can yield ts % 8 != 0; in
    # that corner case slice the table once so the block spans it exactly.
    if k == 1 and ts % 8 != 0 and ts != emb_rows:
        emb_op = emb_table[:S]
        emb_rows = S

    num_s = _cdiv(Sp, ts)
    num_b = _cdiv(B, bt)

    if num_b == 1:
        grid = (num_s,)
        x_map = lambda s: (0, s, 0)
        emb_map = lambda s: (s, 0)
    elif num_s == 1:
        grid = (num_b,)
        x_map = lambda b: (b, 0, 0)
        emb_map = lambda b: (0, 0)
    else:
        # Batch tiles innermost: the emb block index is constant across the
        # inner loop, so Pallas skips re-DMAing the embedding tile.
        grid = (num_s, num_b)
        x_map = lambda s, b: (b, s, 0)
        emb_map = lambda s, b: (s, 0)

    # Explicit scoped-VMEM limit sized to the actual double-buffered working
    # set (safe on v5e's 16 MiB default, controlled headroom on v6e/v7x).
    working = 2 * (bt * ts * Dp * (x_item + out_item) + ts * Dp * emb_item)
    vmem_limit = int(min(max(2 * working, 32 << 20),
                         max(phys - (8 << 20), 16 << 20)))

    alias = {0: 0} if (donate_x and out_dtype == x.dtype) else {}

    bytes_accessed = B * Sp * Dp * (x_item + out_item) + Sp * Dp * emb_item
    cost = pl.CostEstimate(flops=B * Sp * Dp, transcendentals=0,
                           bytes_accessed=bytes_accessed)

    out = pl.pallas_call(
        _pos_enc_kernel,
        out_shape=jax.ShapeDtypeStruct((B, Sp, Dp), out_dtype),
        grid_spec=pltpu.PrefetchScalarGridSpec(
            num_scalar_prefetch=0,
            grid=grid,
            in_specs=[
                pl.BlockSpec((bt, ts, Dp), x_map),   # x tile
                pl.BlockSpec((ts, Dp), emb_map),     # positional-emb tile
            ],
            out_specs=pl.BlockSpec((bt, ts, Dp), x_map),
        ),
        compiler_params=pltpu.CompilerParams(
            dimension_semantics=("parallel",) * len(grid),
            vmem_limit_bytes=vmem_limit,
        ),
        input_output_aliases=alias,
        cost_estimate=cost,
    )(x_op, emb_op)

    out = out.reshape(B, S, D)
    if squeeze_batch:
        out = out[0]
    return out


if __name__ == "__main__":
    # Module hyperparameters (small, consistent with the PyTorch forward).
    d_model = 32
    num_positions = 20
    batch = 2
    seq_len = 8

    key = jax.random.PRNGKey(0)
    k_emb, k_x, k_emb2, k_x2, k_x3, k_emb4, k_x4 = jax.random.split(key, 7)

    # nn.Embedding default init ~ N(0, 1); deterministic synthetic weights.
    emb_table = jax.random.normal(k_emb, (num_positions, d_model),
                                  dtype=jnp.float32)
    x = jax.random.normal(k_x, (batch, seq_len, d_model), dtype=jnp.float32)

    # Batched path (lane-dense fold: d_model=32 -> folded to 128 lanes).
    ref = x + emb_table[:seq_len][None, :, :]
    out = jax.block_until_ready(
        positional_encoding(x, emb_table, batched=True, use_pallas=True))
    assert out.shape == (batch, seq_len, d_model) and out.dtype == jnp.float32
    assert jnp.allclose(out, ref, atol=1e-6, rtol=1e-6)

    # Unbatched path ([seq, d_model]).
    x_unb = x[0]
    ref_unb = x_unb + emb_table[:seq_len]
    out_unb = jax.block_until_ready(
        positional_encoding(x_unb, emb_table, batched=False, use_pallas=True))
    assert out_unb.shape == (seq_len, d_model)
    assert jnp.allclose(out_unb, ref_unb, atol=1e-6, rtol=1e-6)

    # 128-aligned path (full-table BlockSpec row selection, batch tiling).
    d2, np2, s2 = 128, 64, 16
    emb_t2 = jax.random.normal(k_emb2, (np2, d2), dtype=jnp.float32)
    x2 = jax.random.normal(k_x2, (batch, s2, d2), dtype=jnp.float32)
    ref2 = x2 + emb_t2[:s2][None, :, :]
    out2 = jax.block_until_ready(
        positional_encoding(x2, emb_t2, batched=True, use_pallas=True))
    assert jnp.allclose(out2, ref2, atol=1e-6, rtol=1e-6)

    # Fold-impossible corner (S % k != 0) -> clean XLA fallback, same numerics.
    x3 = jax.random.normal(k_x3, (batch, 10, d_model), dtype=jnp.float32)
    ref3 = x3 + emb_table[:10][None, :, :]
    out3 = jax.block_until_ready(
        positional_encoding(x3, emb_table, batched=True, use_pallas=True))
    assert jnp.allclose(out3, ref3, atol=1e-6, rtol=1e-6)

    # Force multi-step grids with a tiny VMEM budget (exercises 2-D grid,
    # balanced seq tiling, and the collapsed batch-only grid).
    emb_t4 = jax.random.normal(k_emb4, (128, 128), dtype=jnp.float32)
    x4 = jax.random.normal(k_x4, (4, 64, 128), dtype=jnp.float32)
    ref4 = x4 + emb_t4[:64][None, :, :]
    out4 = jax.block_until_ready(
        positional_encoding(x4, emb_t4, batched=True, use_pallas=True,
                            _vmem_budget=64 * 1024))            # grid=(4,4)
    assert jnp.allclose(out4, ref4, atol=1e-6, rtol=1e-6)

    x5 = x4[:, :8, :]
    ref5 = x5 + emb_t4[:8][None, :, :]
    out5 = jax.block_until_ready(
        positional_encoding(x5, emb_t4, batched=True, use_pallas=True,
                            _vmem_budget=64 * 1024))            # grid=(2,)
    assert jnp.allclose(out5, ref5, atol=1e-6, rtol=1e-6)

    # Opt-in donation path (x2_copy not used afterwards).
    x2_copy = x2 + 0.0
    out6 = jax.block_until_ready(
        positional_encoding(x2_copy, emb_t2, batched=True, use_pallas=True,
                            donate_x=True))
    assert jnp.allclose(out6, ref2, atol=1e-6, rtol=1e-6)

    print("KERNEL_OK")
</pallas_src>

<mosaic_0001>
module attributes {stable_mosaic.version = 11 : i64} {
  func.func @_pos_enc_kernel(%arg0: i32, %arg1: memref<2x2x128xf32, #tpu.memory_space<vmem>>, %arg2: memref<2x128xf32, #tpu.memory_space<vmem>>, %arg3: memref<2x2x128xf32, #tpu.memory_space<vmem>>) attributes {dimension_semantics = [#tpu.dimension_semantics<parallel>], iteration_bounds = array<i64: 1>, scalar_prefetch = 0 : i64, scratch_operands = 0 : i64, tpu.core_type = #tpu.core_type<tc>, window_params = [{transform_indices = @transform_0, window_bounds = array<i64: 2, 2, 128>}, {transform_indices = @transform_1, window_bounds = array<i64: 2, 128>}, {transform_indices = @transform_2, window_bounds = array<i64: 2, 2, 128>}]} {
    %c0 = arith.constant 0 : index
    %c0_0 = arith.constant 0 : index
    %c0_1 = arith.constant 0 : index
    %0 = vector.load %arg1[%c0, %c0_0, %c0_1] : memref<2x2x128xf32, #tpu.memory_space<vmem>>, vector<2x2x128xf32>
    %c0_2 = arith.constant 0 : index
    %c0_3 = arith.constant 0 : index
    %1 = vector.load %arg2[%c0_2, %c0_3] : memref<2x128xf32, #tpu.memory_space<vmem>>, vector<2x128xf32>
    %2 = vector.shape_cast %1 : vector<2x128xf32> to vector<1x2x128xf32>
    %3 = vector.broadcast %2 : vector<1x2x128xf32> to vector<2x2x128xf32>
    %4 = arith.addf %0, %3 : vector<2x2x128xf32>
    %c0_4 = arith.constant 0 : index
    %c0_5 = arith.constant 0 : index
    %c0_6 = arith.constant 0 : index
    %5 = vector.load %arg3[%c0_4, %c0_5, %c0_6] : memref<2x2x128xf32, #tpu.memory_space<vmem>>, vector<2x2x128xf32>
    tpu.vector_store %arg3[%c0_4, %c0_5, %c0_6], %4 {strides = array<i32>} : memref<2x2x128xf32, #tpu.memory_space<vmem>>, vector<2x2x128xf32>,
    return
  }
  func.func @transform_0(%arg0: i32) -> (i32, i32, i32) {
    %c0_i32 = arith.constant 0 : i32
    %c0_i32_0 = arith.constant 0 : i32
    %c0_i32_1 = arith.constant 0 : i32
    return %c0_i32, %arg0, %c0_i32_0 : i32, i32, i32
  }
  func.func @transform_1(%arg0: i32) -> (i32, i32) {
    %c0_i32 = arith.constant 0 : i32
    %c0_i32_0 = arith.constant 0 : i32
    return %arg0, %c0_i32 : i32, i32
  }
  func.func @transform_2(%arg0: i32) -> (i32, i32, i32) {
    %c0_i32 = arith.constant 0 : i32
    %c0_i32_0 = arith.constant 0 : i32
    %c0_i32_1 = arith.constant 0 : i32
    return %c0_i32, %arg0, %c0_i32_0 : i32, i32, i32
  }
}

</mosaic_0001>

<llo_original>
// kernel: tpu_custom_call.1
$region0: #{tpu_custom_call.1}
  #allocation0 [shape = 'u32[]', space=smem, size = 0x4, offset = 0x4, fixed_abs, tag = 'smem constant byte address 0x4 - core index']
  #allocation1 [shape = 'u32[72,128]{1,0:T(1,128)}', space=vmem, size = 0x9000, scoped, tag = 'internal scratch']
  %s0 = inlined_call_operand.hbm [shape: f32[2,2,128], index: 0, kind: input, shape index: {}]
  %s1 = inlined_call_operand.hbm [shape: f32[2,128], index: 1, kind: input, shape index: {}]
  %s2 = inlined_call_operand.hbm [shape: f32[2,2,128], index: 2, kind: output, shape index: {}]
  %s3 = sld [smem:[#allocation0]]
  $region26: #{tpu_custom_call.1} parent=0
    _
  %s5 = ssub.s32 1, %s3
  %s6 = scalar_select 0, %s5, %s3
  $region1: #{tpu_custom_call.1} parent=0
    #allocation2 [shape = 'u8[2048]{0}', space=vmem, size = 0x800, scoped, tag = 'input window, operand 0, single buffered']
    #allocation3 [shape = 's32[1]{0}', space=sflag, size = 0x4, scoped, tag = 'scoped memory for tpu_custom_call.1']
    #allocation4 [shape = 's32[1]{0}', space=sflag, size = 0x4, scoped, tag = 'scoped memory for tpu_custom_call.1']
    #allocation5 [shape = 'u8[1024]{0}', space=vmem, size = 0x400, scoped, tag = 'input window, operand 1, single buffered']
    #allocation6 [shape = 's32[1]{0}', space=sflag, size = 0x4, scoped, tag = 'scoped memory for tpu_custom_call.1']
    #allocation7 [shape = 'u8[2048]{0}', space=vmem, size = 0x800, scoped, tag = 'output window, operand 0, single buffered']
    %7 = vsyncpa [#allocation3], 0
    %8 = vsyncpa [#allocation6], 0
    %9 = vsyncpa [#allocation4], 0
    // Predicated region
    $region2: #{tpu_custom_call.1} parent=1 // pred_check
      _
    $region3: #{tpu_custom_call.1} parent=1 // pred_check_branch
      %11 = sbr.rel (0) target = $region5
    $region4: #{tpu_custom_call.1} parent=1 // pred_region
      %13 = vsyncadd [#allocation3], 0
      %s14 = sshll.u32 %s0, 4
      %s15 = int_to_ptr.hbm [resolvable:$true] %s14
      %s16 = sshll.u32 [#allocation2], 4
      %s17 = int_to_ptr.vmem [resolvable:$true] %s16
      %22 = dma.hbm_to_vmem [thread:$0]  %s15, 64, %s17, [#allocation3], 32, 32, 2
    $region5: #{tpu_custom_call.1} parent=1 // pred_fallthru
      _
    // Predicated region
    $region6: #{tpu_custom_call.1} parent=1 // pred_check
      _
    $region7: #{tpu_custom_call.1} parent=1 // pred_check_branch
      %24 = sbr.rel (0) target = $region9
    $region8: #{tpu_custom_call.1} parent=1 // pred_region
      %26 = vsyncadd [#allocation6], 0
      %s28 = sshll.u32 %s1, 4
      %s29 = int_to_ptr.hbm [resolvable:$true] %s28
      %s30 = sshll.u32 [#allocation5], 4
      %s31 = int_to_ptr.vmem [resolvable:$true] %s30
      %33 = dma.hbm_to_vmem [thread:$0]  %s29, 32, %s31, [#allocation6]
    $region9: #{tpu_custom_call.1} parent=1 // pred_fallthru
      _
    // Predicated region
    $region10: #{tpu_custom_call.1} parent=1 // pred_check
      _
    $region11: #{tpu_custom_call.1} parent=1 // pred_check_branch
      %35 = sbr.rel (0) target = $region13
    $region12: #{tpu_custom_call.1} parent=1 // pred_region
      %37 = dma.done [#allocation3], 64
    $region13: #{tpu_custom_call.1} parent=1 // pred_fallthru
      _
    // Predicated region
    $region14: #{tpu_custom_call.1} parent=1 // pred_check
      _
    $region15: #{tpu_custom_call.1} parent=1 // pred_check_branch
      %39 = sbr.rel (0) target = $region17
    $region16: #{tpu_custom_call.1} parent=1 // pred_region
      %41 = dma.done [#allocation6], 32
    $region17: #{tpu_custom_call.1} parent=1 // pred_fallthru
      _
    %v42 = vld [vmem:[#allocation2] sm:$0x3]
    %v43 = vld [vmem:[#allocation2 + $0x2] sm:$0x3]
    %v44 = vld [vmem:[#allocation5] sm:$0x3]
    %v45 = vadd.f32 %v42, %v44
    %v46 = vadd.f32 %v43, %v44
    %47 = vst [vmem:[#allocation7] sm:$0x3] %v45
    %48 = vst [vmem:[#allocation7 + $0x2] sm:$0x3] %v46
    // Predicated region
    $region18: #{tpu_custom_call.1} parent=1 // pred_check
      _
    $region19: #{tpu_custom_call.1} parent=1 // pred_check_branch
      %50 = sbr.rel (0) target = $region21
    $region20: #{tpu_custom_call.1} parent=1 // pred_region
      %52 = vsyncadd [#allocation4], 0
      %s53 = sshll.u32 [#allocation7], 4
      %s54 = int_to_ptr.vmem [resolvable:$true] %s53
      %s55 = sshll.u32 %s2, 4
      %s56 = int_to_ptr.hbm [resolvable:$true] %s55
      %61 = dma.vmem_to_hbm [thread:$0]  %s54, 64, %s56, [#allocation4], 32, 32, 2
    $region21: #{tpu_custom_call.1} parent=1 // pred_fallthru
      _
    // Predicated region
    $region22: #{tpu_custom_call.1} parent=1 // pred_check
      _
    $region23: #{tpu_custom_call.1} parent=1 // pred_check_branch
      %63 = sbr.rel (0) target = $region25
    $region24: #{tpu_custom_call.1} parent=1 // pred_region
      %65 = dma.done [#allocation4], 64
    $region25: #{tpu_custom_call.1} parent=1 // pred_fallthru
      _
    %66 = vsyncpa [#allocation3], 1
    %67 = vsyncpa [#allocation6], 1
    %68 = vsyncpa [#allocation4], 1

</llo_original>
